<compile_context>
chip_gen: v7x
topology: tpu7x:2x2x1
jax: 0.10.0
libtpu: 0.0.40
codegen_flags: <defaults>
</compile_context>

<pallas_src>
import jax
import jax.numpy as jnp
import numpy as np
from jax.experimental import pallas as pl
from jax.experimental.pallas import tpu as pltpu

N, C_IN, H, W = 2, 1, 16, 16
C_OUT, KH, KW = 2, 3, 3
HC, WC = H - KH + 1, W - KW + 1      # 14, 14  (conv output)
PH, PW = HC // 2, WC // 2            # 7, 7    (pooled output)
WIDE = C_OUT * WC                    # 28      (both channels side by side on lanes)
WPRE = WIDE - 1                      # 27      (pre-pool columns in wide layout)
NSLICE = N * C_OUT                   # 4       (batch, out-channel) slices


def conv_pool_kernel(x_ref, wrow_ref, brow_ref, sr_ref, scbd_ref, o_ref):
    # Single program: computes every (n, co) slice in one pass.
    wr = wrow_ref[...]                                   # (KH*KW, WIDE) f32
    vms = []
    for n in range(N):
        xs = x_ref[n]                                    # (H, W) f32
        # 3 column-shifted copies, each lane-duplicated so both output
        # channels share one wide accumulator (3 concats instead of 9).
        wide_cols = []
        for kj in range(KW):
            col = xs[:, kj:kj + WC]                      # (H, WC)
            wide_cols.append(jnp.concatenate([col, col], axis=1))   # (H, WIDE)

        # --- 3x3 valid conv (cross-correlation, as in PyTorch), both channels ---
        acc = jnp.zeros((HC, WIDE), jnp.float32)
        for ki in range(KH):
            for kj in range(KW):
                t = ki * KW + kj
                patch = wide_cols[kj][ki:ki + HC, :]     # (HC, WIDE) sublane slice
                acc = acc + patch * wr[t:t + 1, :]       # per-tap weight row

        # --- 2x2 stride-2 max pool: pairwise maxima (VPU) ---
        # Column 13 mixes the two channels but is odd, so it is never selected.
        hm = jnp.maximum(acc[:, :-1], acc[:, 1:])        # (HC, WPRE)
        vm = jnp.maximum(hm[:-1, :], hm[1:, :])          # (HC-1, WPRE): 2x2 max at (r,c)
        vms.append(vm)

    # Stack both images along lanes and compact with exactly two matmuls.
    vm_all = jnp.concatenate(vms, axis=1)                # (13, N*WPRE) = (13, 54)
    tmp = jnp.dot(sr_ref[...], vm_all,
                  preferred_element_type=jnp.float32)    # (7, 54)  even-row select
    out = jnp.dot(tmp, scbd_ref[...],
                  preferred_element_type=jnp.float32)    # (7, 28)  even-col select (block diag)
    o_ref[...] = out + brow_ref[...]                     # bias folded post-pool, single store


def net_forward(x, w, b):
    # x: (N, 1, H, W) f32 ; w: (C_OUT, 1, KH, KW) ; b: (C_OUT,)
    x2 = x[:, 0, :, :].astype(jnp.float32)                          # (N, H, W)
    b = b.astype(jnp.float32)

    # Per-tap weight rows: row t = [w[0,t]]*WC ++ [w[1,t]]*WC   -> (9, 28)
    w_rows = jnp.repeat(
        w[:, 0].reshape(C_OUT, KH * KW).T.astype(jnp.float32), WC, axis=1)

    # Bias row matching the output column layout [n0c0, n0c1, n1c0, n1c1] -> (1, 28)
    b_row = jnp.tile(jnp.repeat(b, PW), N).reshape(1, NSLICE * PW)

    # 0/1 selection matrices (exact in f32):
    #   sr[i, r]      = 1 iff r == 2i   -> picks even rows
    #   sc_wide[c, j] = 1 iff c == 2j   -> picks even cols of the wide (27-col) slab
    sr = (jnp.arange(HC - 1)[None, :] == 2 * jnp.arange(PH)[:, None]).astype(jnp.float32)      # (7, 13)
    sc_wide = (jnp.arange(WPRE)[:, None] == 2 * jnp.arange(C_OUT * PW)[None, :]).astype(jnp.float32)  # (27, 14)
    scbd = jnp.kron(jnp.eye(N, dtype=jnp.float32), sc_wide)                                     # (54, 28)

    out_flat = pl.pallas_call(
        conv_pool_kernel,
        out_shape=jax.ShapeDtypeStruct((PH, NSLICE * PW), jnp.float32),
        in_specs=[
            pl.BlockSpec(memory_space=pltpu.MemorySpace.VMEM),   # x       (N, H, W)
            pl.BlockSpec(memory_space=pltpu.MemorySpace.VMEM),   # w_rows  (9, 28)
            pl.BlockSpec(memory_space=pltpu.MemorySpace.VMEM),   # b_row   (1, 28)
            pl.BlockSpec(memory_space=pltpu.MemorySpace.VMEM),   # sr      (7, 13)
            pl.BlockSpec(memory_space=pltpu.MemorySpace.VMEM),   # scbd    (54, 28)
        ],
        out_specs=pl.BlockSpec(memory_space=pltpu.MemorySpace.VMEM),
    )(x2, w_rows, b_row, sr, scbd)

    # (PH, NSLICE*PW) -> (N, C_OUT, PH, PW): pure layout plumbing in the wrapper.
    out = out_flat.reshape(PH, NSLICE, PW).transpose(1, 0, 2).reshape(N, C_OUT, PH, PW)
    return out


def net_forward_ref(x, w, b):
    # Pure-JAX reference (NCHW conv + max-pool) for correctness check.
    y = jax.lax.conv_general_dilated(
        x, w, window_strides=(1, 1), padding="VALID",
        dimension_numbers=("NCHW", "OIHW", "NCHW"))
    y = y + b[None, :, None, None]
    y = jax.lax.reduce_window(
        y, -jnp.inf, jax.lax.max,
        window_dimensions=(1, 1, 2, 2), window_strides=(1, 1, 2, 2),
        padding="VALID")
    return y


if __name__ == "__main__":
    key = jax.random.PRNGKey(0)
    kx, kw, kb = jax.random.split(key, 3)
    # deterministic synthetic parameters (shapes from Net.__init__)
    x = jax.random.normal(kx, (N, C_IN, H, W), jnp.float32)
    w = jax.random.normal(kw, (C_OUT, C_IN, KH, KW), jnp.float32) * 0.3
    b = jax.random.normal(kb, (C_OUT,), jnp.float32) * 0.1

    out = jax.block_until_ready(net_forward(x, w, b))
    ref = net_forward_ref(x, w, b)
    np.testing.assert_allclose(np.asarray(out), np.asarray(ref), rtol=1e-5, atol=1e-5)
    print("KERNEL_OK")
</pallas_src>

<mosaic_0001>
module attributes {stable_mosaic.version = 11 : i64} {
  func.func @conv_pool_kernel(%arg0: memref<2x16x16xf32, #tpu.memory_space<vmem>>, %arg1: memref<9x28xf32, #tpu.memory_space<vmem>>, %arg2: memref<1x28xf32, #tpu.memory_space<vmem>>, %arg3: memref<7x13xf32, #tpu.memory_space<vmem>>, %arg4: memref<54x28xf32, #tpu.memory_space<vmem>>, %arg5: memref<7x28xf32, #tpu.memory_space<vmem>>) attributes {dimension_semantics = [], scalar_prefetch = 0 : i64, scratch_operands = 0 : i64, tpu.core_type = #tpu.core_type<tc>} {
    %c0 = arith.constant 0 : index
    %c0_0 = arith.constant 0 : index
    %0 = vector.load %arg1[%c0, %c0_0] : memref<9x28xf32, #tpu.memory_space<vmem>>, vector<9x28xf32>
    %c0_1 = arith.constant 0 : index
    %c0_2 = arith.constant 0 : index
    %c0_3 = arith.constant 0 : index
    %1 = vector.load %arg0[%c0_1, %c0_2, %c0_3] : memref<2x16x16xf32, #tpu.memory_space<vmem>>, vector<1x16x16xf32>
    %2 = vector.shape_cast %1 : vector<1x16x16xf32> to vector<16x16xf32>
    %3 = vector.extract_strided_slice %2 {offsets = [0, 0], sizes = [16, 14], strides = [1, 1]} : vector<16x16xf32> to vector<16x14xf32>
    %4 = tpu.concatenate %3, %3 in 1 : vector<16x14xf32>, vector<16x14xf32> -> vector<16x28xf32>
    %5 = vector.extract_strided_slice %2 {offsets = [0, 1], sizes = [16, 14], strides = [1, 1]} : vector<16x16xf32> to vector<16x14xf32>
    %6 = tpu.concatenate %5, %5 in 1 : vector<16x14xf32>, vector<16x14xf32> -> vector<16x28xf32>
    %7 = vector.extract_strided_slice %2 {offsets = [0, 2], sizes = [16, 14], strides = [1, 1]} : vector<16x16xf32> to vector<16x14xf32>
    %8 = tpu.concatenate %7, %7 in 1 : vector<16x14xf32>, vector<16x14xf32> -> vector<16x28xf32>
    %cst = arith.constant 0.000000e+00 : f32
    %9 = vector.broadcast %cst : f32 to vector<14x28xf32>
    %10 = vector.extract_strided_slice %4 {offsets = [0, 0], sizes = [14, 28], strides = [1, 1]} : vector<16x28xf32> to vector<14x28xf32>
    %11 = vector.extract_strided_slice %0 {offsets = [0, 0], sizes = [1, 28], strides = [1, 1]} : vector<9x28xf32> to vector<1x28xf32>
    %12 = vector.broadcast %11 : vector<1x28xf32> to vector<14x28xf32>
    %13 = arith.mulf %10, %12 : vector<14x28xf32>
    %14 = arith.addf %9, %13 : vector<14x28xf32>
    %15 = vector.extract_strided_slice %6 {offsets = [0, 0], sizes = [14, 28], strides = [1, 1]} : vector<16x28xf32> to vector<14x28xf32>
    %16 = vector.extract_strided_slice %0 {offsets = [1, 0], sizes = [1, 28], strides = [1, 1]} : vector<9x28xf32> to vector<1x28xf32>
    %17 = vector.broadcast %16 : vector<1x28xf32> to vector<14x28xf32>
    %18 = arith.mulf %15, %17 : vector<14x28xf32>
    %19 = arith.addf %14, %18 : vector<14x28xf32>
    %20 = vector.extract_strided_slice %8 {offsets = [0, 0], sizes = [14, 28], strides = [1, 1]} : vector<16x28xf32> to vector<14x28xf32>
    %21 = vector.extract_strided_slice %0 {offsets = [2, 0], sizes = [1, 28], strides = [1, 1]} : vector<9x28xf32> to vector<1x28xf32>
    %22 = vector.broadcast %21 : vector<1x28xf32> to vector<14x28xf32>
    %23 = arith.mulf %20, %22 : vector<14x28xf32>
    %24 = arith.addf %19, %23 : vector<14x28xf32>
    %25 = vector.extract_strided_slice %4 {offsets = [1, 0], sizes = [14, 28], strides = [1, 1]} : vector<16x28xf32> to vector<14x28xf32>
    %26 = vector.extract_strided_slice %0 {offsets = [3, 0], sizes = [1, 28], strides = [1, 1]} : vector<9x28xf32> to vector<1x28xf32>
    %27 = vector.broadcast %26 : vector<1x28xf32> to vector<14x28xf32>
    %28 = arith.mulf %25, %27 : vector<14x28xf32>
    %29 = arith.addf %24, %28 : vector<14x28xf32>
    %30 = vector.extract_strided_slice %6 {offsets = [1, 0], sizes = [14, 28], strides = [1, 1]} : vector<16x28xf32> to vector<14x28xf32>
    %31 = vector.extract_strided_slice %0 {offsets = [4, 0], sizes = [1, 28], strides = [1, 1]} : vector<9x28xf32> to vector<1x28xf32>
    %32 = vector.broadcast %31 : vector<1x28xf32> to vector<14x28xf32>
    %33 = arith.mulf %30, %32 : vector<14x28xf32>
    %34 = arith.addf %29, %33 : vector<14x28xf32>
    %35 = vector.extract_strided_slice %8 {offsets = [1, 0], sizes = [14, 28], strides = [1, 1]} : vector<16x28xf32> to vector<14x28xf32>
    %36 = vector.extract_strided_slice %0 {offsets = [5, 0], sizes = [1, 28], strides = [1, 1]} : vector<9x28xf32> to vector<1x28xf32>
    %37 = vector.broadcast %36 : vector<1x28xf32> to vector<14x28xf32>
    %38 = arith.mulf %35, %37 : vector<14x28xf32>
    %39 = arith.addf %34, %38 : vector<14x28xf32>
    %40 = vector.extract_strided_slice %4 {offsets = [2, 0], sizes = [14, 28], strides = [1, 1]} : vector<16x28xf32> to vector<14x28xf32>
    %41 = vector.extract_strided_slice %0 {offsets = [6, 0], sizes = [1, 28], strides = [1, 1]} : vector<9x28xf32> to vector<1x28xf32>
    %42 = vector.broadcast %41 : vector<1x28xf32> to vector<14x28xf32>
    %43 = arith.mulf %40, %42 : vector<14x28xf32>
    %44 = arith.addf %39, %43 : vector<14x28xf32>
    %45 = vector.extract_strided_slice %6 {offsets = [2, 0], sizes = [14, 28], strides = [1, 1]} : vector<16x28xf32> to vector<14x28xf32>
    %46 = vector.extract_strided_slice %0 {offsets = [7, 0], sizes = [1, 28], strides = [1, 1]} : vector<9x28xf32> to vector<1x28xf32>
    %47 = vector.broadcast %46 : vector<1x28xf32> to vector<14x28xf32>
    %48 = arith.mulf %45, %47 : vector<14x28xf32>
    %49 = arith.addf %44, %48 : vector<14x28xf32>
    %50 = vector.extract_strided_slice %8 {offsets = [2, 0], sizes = [14, 28], strides = [1, 1]} : vector<16x28xf32> to vector<14x28xf32>
    %51 = vector.extract_strided_slice %0 {offsets = [8, 0], sizes = [1, 28], strides = [1, 1]} : vector<9x28xf32> to vector<1x28xf32>
    %52 = vector.broadcast %51 : vector<1x28xf32> to vector<14x28xf32>
    %53 = arith.mulf %50, %52 : vector<14x28xf32>
    %54 = arith.addf %49, %53 : vector<14x28xf32>
    %55 = vector.extract_strided_slice %54 {offsets = [0, 0], sizes = [14, 27], strides = [1, 1]} : vector<14x28xf32> to vector<14x27xf32>
    %56 = vector.extract_strided_slice %54 {offsets = [0, 1], sizes = [14, 27], strides = [1, 1]} : vector<14x28xf32> to vector<14x27xf32>
    %57 = arith.maximumf %55, %56 : vector<14x27xf32>
    %58 = vector.extract_strided_slice %57 {offsets = [0, 0], sizes = [13, 27], strides = [1, 1]} : vector<14x27xf32> to vector<13x27xf32>
    %59 = vector.extract_strided_slice %57 {offsets = [1, 0], sizes = [13, 27], strides = [1, 1]} : vector<14x27xf32> to vector<13x27xf32>
    %60 = arith.maximumf %58, %59 : vector<13x27xf32>
    %c1 = arith.constant 1 : index
    %c0_4 = arith.constant 0 : index
    %c0_5 = arith.constant 0 : index
    %61 = vector.load %arg0[%c1, %c0_4, %c0_5] : memref<2x16x16xf32, #tpu.memory_space<vmem>>, vector<1x16x16xf32>
    %62 = vector.shape_cast %61 : vector<1x16x16xf32> to vector<16x16xf32>
    %63 = vector.extract_strided_slice %62 {offsets = [0, 0], sizes = [16, 14], strides = [1, 1]} : vector<16x16xf32> to vector<16x14xf32>
    %64 = tpu.concatenate %63, %63 in 1 : vector<16x14xf32>, vector<16x14xf32> -> vector<16x28xf32>
    %65 = vector.extract_strided_slice %62 {offsets = [0, 1], sizes = [16, 14], strides = [1, 1]} : vector<16x16xf32> to vector<16x14xf32>
    %66 = tpu.concatenate %65, %65 in 1 : vector<16x14xf32>, vector<16x14xf32> -> vector<16x28xf32>
    %67 = vector.extract_strided_slice %62 {offsets = [0, 2], sizes = [16, 14], strides = [1, 1]} : vector<16x16xf32> to vector<16x14xf32>
    %68 = tpu.concatenate %67, %67 in 1 : vector<16x14xf32>, vector<16x14xf32> -> vector<16x28xf32>
    %cst_6 = arith.constant 0.000000e+00 : f32
    %69 = vector.broadcast %cst_6 : f32 to vector<14x28xf32>
    %70 = vector.extract_strided_slice %64 {offsets = [0, 0], sizes = [14, 28], strides = [1, 1]} : vector<16x28xf32> to vector<14x28xf32>
    %71 = vector.extract_strided_slice %0 {offsets = [0, 0], sizes = [1, 28], strides = [1, 1]} : vector<9x28xf32> to vector<1x28xf32>
    %72 = vector.broadcast %71 : vector<1x28xf32> to vector<14x28xf32>
    %73 = arith.mulf %70, %72 : vector<14x28xf32>
    %74 = arith.addf %69, %73 : vector<14x28xf32>
    %75 = vector.extract_strided_slice %66 {offsets = [0, 0], sizes = [14, 28], strides = [1, 1]} : vector<16x28xf32> to vector<14x28xf32>
    %76 = vector.extract_strided_slice %0 {offsets = [1, 0], sizes = [1, 28], strides = [1, 1]} : vector<9x28xf32> to vector<1x28xf32>
    %77 = vector.broadcast %76 : vector<1x28xf32> to vector<14x28xf32>
    %78 = arith.mulf %75, %77 : vector<14x28xf32>
    %79 = arith.addf %74, %78 : vector<14x28xf32>
    %80 = vector.extract_strided_slice %68 {offsets = [0, 0], sizes = [14, 28], strides = [1, 1]} : vector<16x28xf32> to vector<14x28xf32>
    %81 = vector.extract_strided_slice %0 {offsets = [2, 0], sizes = [1, 28], strides = [1, 1]} : vector<9x28xf32> to vector<1x28xf32>
    %82 = vector.broadcast %81 : vector<1x28xf32> to vector<14x28xf32>
    %83 = arith.mulf %80, %82 : vector<14x28xf32>
    %84 = arith.addf %79, %83 : vector<14x28xf32>
    %85 = vector.extract_strided_slice %64 {offsets = [1, 0], sizes = [14, 28], strides = [1, 1]} : vector<16x28xf32> to vector<14x28xf32>
    %86 = vector.extract_strided_slice %0 {offsets = [3, 0], sizes = [1, 28], strides = [1, 1]} : vector<9x28xf32> to vector<1x28xf32>
    %87 = vector.broadcast %86 : vector<1x28xf32> to vector<14x28xf32>
    %88 = arith.mulf %85, %87 : vector<14x28xf32>
    %89 = arith.addf %84, %88 : vector<14x28xf32>
    %90 = vector.extract_strided_slice %66 {offsets = [1, 0], sizes = [14, 28], strides = [1, 1]} : vector<16x28xf32> to vector<14x28xf32>
    %91 = vector.extract_strided_slice %0 {offsets = [4, 0], sizes = [1, 28], strides = [1, 1]} : vector<9x28xf32> to vector<1x28xf32>
    %92 = vector.broadcast %91 : vector<1x28xf32> to vector<14x28xf32>
    %93 = arith.mulf %90, %92 : vector<14x28xf32>
    %94 = arith.addf %89, %93 : vector<14x28xf32>
    %95 = vector.extract_strided_slice %68 {offsets = [1, 0], sizes = [14, 28], strides = [1, 1]} : vector<16x28xf32> to vector<14x28xf32>
    %96 = vector.extract_strided_slice %0 {offsets = [5, 0], sizes = [1, 28], strides = [1, 1]} : vector<9x28xf32> to vector<1x28xf32>
    %97 = vector.broadcast %96 : vector<1x28xf32> to vector<14x28xf32>
    %98 = arith.mulf %95, %97 : vector<14x28xf32>
    %99 = arith.addf %94, %98 : vector<14x28xf32>
    %100 = vector.extract_strided_slice %64 {offsets = [2, 0], sizes = [14, 28], strides = [1, 1]} : vector<16x28xf32> to vector<14x28xf32>
    %101 = vector.extract_strided_slice %0 {offsets = [6, 0], sizes = [1, 28], strides = [1, 1]} : vector<9x28xf32> to vector<1x28xf32>
    %102 = vector.broadcast %101 : vector<1x28xf32> to vector<14x28xf32>
    %103 = arith.mulf %100, %102 : vector<14x28xf32>
    %104 = arith.addf %99, %103 : vector<14x28xf32>
    %105 = vector.extract_strided_slice %66 {offsets = [2, 0], sizes = [14, 28], strides = [1, 1]} : vector<16x28xf32> to vector<14x28xf32>
    %106 = vector.extract_strided_slice %0 {offsets = [7, 0], sizes = [1, 28], strides = [1, 1]} : vector<9x28xf32> to vector<1x28xf32>
    %107 = vector.broadcast %106 : vector<1x28xf32> to vector<14x28xf32>
    %108 = arith.mulf %105, %107 : vector<14x28xf32>
    %109 = arith.addf %104, %108 : vector<14x28xf32>
    %110 = vector.extract_strided_slice %68 {offsets = [2, 0], sizes = [14, 28], strides = [1, 1]} : vector<16x28xf32> to vector<14x28xf32>
    %111 = vector.extract_strided_slice %0 {offsets = [8, 0], sizes = [1, 28], strides = [1, 1]} : vector<9x28xf32> to vector<1x28xf32>
    %112 = vector.broadcast %111 : vector<1x28xf32> to vector<14x28xf32>
    %113 = arith.mulf %110, %112 : vector<14x28xf32>
    %114 = arith.addf %109, %113 : vector<14x28xf32>
    %115 = vector.extract_strided_slice %114 {offsets = [0, 0], sizes = [14, 27], strides = [1, 1]} : vector<14x28xf32> to vector<14x27xf32>
    %116 = vector.extract_strided_slice %114 {offsets = [0, 1], sizes = [14, 27], strides = [1, 1]} : vector<14x28xf32> to vector<14x27xf32>
    %117 = arith.maximumf %115, %116 : vector<14x27xf32>
    %118 = vector.extract_strided_slice %117 {offsets = [0, 0], sizes = [13, 27], strides = [1, 1]} : vector<14x27xf32> to vector<13x27xf32>
    %119 = vector.extract_strided_slice %117 {offsets = [1, 0], sizes = [13, 27], strides = [1, 1]} : vector<14x27xf32> to vector<13x27xf32>
    %120 = arith.maximumf %118, %119 : vector<13x27xf32>
    %121 = tpu.concatenate %60, %120 in 1 : vector<13x27xf32>, vector<13x27xf32> -> vector<13x54xf32>
    %c0_7 = arith.constant 0 : index
    %c0_8 = arith.constant 0 : index
    %122 = vector.load %arg3[%c0_7, %c0_8] : memref<7x13xf32, #tpu.memory_space<vmem>>, vector<7x13xf32>
    %cst_9 = arith.constant dense<0.000000e+00> : vector<7x54xf32>
    %123 = tpu.matmul %122, %121, %cst_9 {dimension_numbers = #tpu.dot_dimension_numbers<[1], [0], [0], [1], [0, 0, 1, 1], [], []>} : vector<7x13xf32>, vector<13x54xf32>, vector<7x54xf32> -> vector<7x54xf32>
    %c0_10 = arith.constant 0 : index
    %c0_11 = arith.constant 0 : index
    %124 = vector.load %arg4[%c0_10, %c0_11] : memref<54x28xf32, #tpu.memory_space<vmem>>, vector<54x28xf32>
    %cst_12 = arith.constant dense<0.000000e+00> : vector<7x28xf32>
    %125 = tpu.matmul %123, %124, %cst_12 {dimension_numbers = #tpu.dot_dimension_numbers<[1], [0], [0], [1], [0, 0, 1, 1], [], []>} : vector<7x54xf32>, vector<54x28xf32>, vector<7x28xf32> -> vector<7x28xf32>
    %c0_13 = arith.constant 0 : index
    %c0_14 = arith.constant 0 : index
    %126 = vector.load %arg2[%c0_13, %c0_14] : memref<1x28xf32, #tpu.memory_space<vmem>>, vector<1x28xf32>
    %127 = vector.broadcast %126 : vector<1x28xf32> to vector<7x28xf32>
    %128 = arith.addf %125, %127 : vector<7x28xf32>
    %c0_15 = arith.constant 0 : index
    %c0_16 = arith.constant 0 : index
    %129 = vector.load %arg5[%c0_15, %c0_16] : memref<7x28xf32, #tpu.memory_space<vmem>>, vector<7x28xf32>
    tpu.vector_store %arg5[%c0_15, %c0_16], %128 {strides = array<i32>} : memref<7x28xf32, #tpu.memory_space<vmem>>, vector<7x28xf32>,
    return
  }
}

</mosaic_0001>

<llo_original>
// kernel: tpu_custom_call.1
$region0: #{tpu_custom_call.1}
  #allocation0 [shape = 'u32[]', space=smem, size = 0x4, offset = 0x4, fixed_abs, tag = 'smem constant byte address 0x4 - core index']
  #allocation1 [shape = 'u32[144,128]{1,0:T(1,128)}', space=vmem, size = 0x12000, scoped, tag = 'internal scratch']
  %s0 = inlined_call_operand.vmem [shape: f32[2,16,16], index: 0, kind: input, shape index: {}]
  %s1 = inlined_call_operand.vmem [shape: f32[9,28], index: 1, kind: input, shape index: {}]
  %s2 = inlined_call_operand.vmem [shape: f32[1,28], index: 2, kind: input, shape index: {}]
  %s3 = inlined_call_operand.vmem [shape: f32[7,13], index: 3, kind: input, shape index: {}]
  %s4 = inlined_call_operand.vmem [shape: f32[54,28], index: 4, kind: input, shape index: {}]
  %s5 = inlined_call_operand.hbm [shape: f32[7,28], index: 5, kind: output, shape index: {}]
  %s6 = sld [smem:[#allocation0]]
  $region30: #{tpu_custom_call.1} parent=0
    _
  %s8 = ssub.s32 1, %s6
  %s9 = scalar_select 0, %s8, %s6
  $region1: #{tpu_custom_call.1} parent=0
    #allocation2 [shape = 'u8[4096]{0}', space=vmem, size = 0x1000, scoped, tag = 'output window, operand 0, single buffered']
    #allocation3 [shape = 's32[1]{0}', space=sflag, size = 0x4, scoped, tag = 'scoped memory for tpu_custom_call.1']
    %10 = vsyncpa [#allocation3], 0
    // Predicated region
    $region2: #{tpu_custom_call.1} parent=1 // pred_check
      _
    $region3: #{tpu_custom_call.1} parent=1 // pred_check_branch
      %12 = sbr.rel (0) target = $region5
    $region4: #{tpu_custom_call.1} parent=1 // pred_region
      _
    $region5: #{tpu_custom_call.1} parent=1 // pred_fallthru
      _
    // Predicated region
    $region6: #{tpu_custom_call.1} parent=1 // pred_check
      _
    $region7: #{tpu_custom_call.1} parent=1 // pred_check_branch
      %14 = sbr.rel (0) target = $region9
    $region8: #{tpu_custom_call.1} parent=1 // pred_region
      _
    $region9: #{tpu_custom_call.1} parent=1 // pred_fallthru
      _
    // Predicated region
    $region10: #{tpu_custom_call.1} parent=1 // pred_check
      _
    $region11: #{tpu_custom_call.1} parent=1 // pred_check_branch
      %16 = sbr.rel (0) target = $region13
    $region12: #{tpu_custom_call.1} parent=1 // pred_region
      _
    $region13: #{tpu_custom_call.1} parent=1 // pred_fallthru
      _
    // Predicated region
    $region14: #{tpu_custom_call.1} parent=1 // pred_check
      _
    $region15: #{tpu_custom_call.1} parent=1 // pred_check_branch
      %18 = sbr.rel (0) target = $region17
    $region16: #{tpu_custom_call.1} parent=1 // pred_region
      _
    $region17: #{tpu_custom_call.1} parent=1 // pred_fallthru
      _
    // Predicated region
    $region18: #{tpu_custom_call.1} parent=1 // pred_check
      _
    $region19: #{tpu_custom_call.1} parent=1 // pred_check_branch
      %20 = sbr.rel (0) target = $region21
    $region20: #{tpu_custom_call.1} parent=1 // pred_region
      _
    $region21: #{tpu_custom_call.1} parent=1 // pred_fallthru
      _
    %v21 = vld [vmem:[%s1] sm:$0xff]
    %v22 = vld [vmem:[%s1 + $0x8] sm:$0x1]
    %v23 = vld [vmem:[%s0] sm:$0xff]
    %v24 = vld [vmem:[%s0 + $0x8] sm:$0xff]
    %27 = vrot.lane.b32.xlu0 %v23, 14
    %v28 = vpop.permute.xlu0 %27
    %29 = vrot.lane.b32.xlu0 %v24, 14
    %v30 = vpop.permute.xlu0 %29
    %vm33 = vcmask 113664
    %v34 = vsel %vm33, %v23, %v28
    %v35 = vsel %vm33, %v24, %v30
    %36 = vrot.lane.b32.xlu0 %v23, 127
    %v37 = vpop.permute.xlu0 %36
    %38 = vrot.lane.b32.xlu0 %v24, 127
    %v39 = vpop.permute.xlu0 %38
    %42 = vrot.lane.b32.xlu0 %v23, 13
    %v43 = vpop.permute.xlu0 %42
    %44 = vrot.lane.b32.xlu0 %v24, 13
    %v45 = vpop.permute.xlu0 %44
    %v48 = vsel %vm33, %v37, %v43
    %v49 = vsel %vm33, %v39, %v45
    %50 = vrot.lane.b32.xlu0 %v23, 126
    %v51 = vpop.permute.xlu0 %50
    %52 = vrot.lane.b32.xlu0 %v24, 126
    %v53 = vpop.permute.xlu0 %52
    %56 = vrot.lane.b32.xlu0 %v23, 12
    %v57 = vpop.permute.xlu0 %56
    %58 = vrot.lane.b32.xlu0 %v24, 12
    %v59 = vpop.permute.xlu0 %58
    %v62 = vsel %vm33, %v51, %v57
    %v63 = vsel %vm33, %v53, %v59
    %v64 = vlaneseq
    %v65 = vshrl.u32 %v64, 7
    %v66 = vsub.s32 0, %v65
    %v67 = vrot.slane %v21, %v66
    %v68 = vmul.f32 %v34, %v67
    %v69 = vmul.f32 %v35, %v67
    %v70 = vadd.f32 %v68, 0.0
    %v71 = vadd.f32 %v69, 0.0
    %v72 = vlaneseq
    %v73 = vshrl.u32 %v72, 7
    %v74 = vsub.s32 1, %v73
    %v75 = vrot.slane %v21, %v74
    %v76 = vmul.f32 %v48, %v75
    %v77 = vmul.f32 %v49, %v75
    %v78 = vadd.f32 %v70, %v76
    %v79 = vadd.f32 %v71, %v77
    %v80 = vlaneseq
    %v81 = vshrl.u32 %v80, 7
    %v82 = vsub.s32 2, %v81
    %v83 = vrot.slane %v21, %v82
    %v84 = vmul.f32 %v62, %v83
    %v85 = vmul.f32 %v63, %v83
    %v86 = vadd.f32 %v78, %v84
    %v87 = vadd.f32 %v79, %v85
    %v88 = vlaneseq
    %v89 = vshrl.u32 %v88, 7
    %v90 = vsub.s32 3, %v89
    %v91 = vrot.slane %v21, %v90
    %v92 = vmul.f32 %v34, %v91
    %v93 = vmul.f32 %v35, %v91
    %vm96 = vcmask 1046528
    %v97 = vrot.slane %v92, 1
    %v98 = vrot.slane %v93, 1
    %v99 = vsel %vm96, %v97, %v98
    %v102 = vadd.f32 %v86, %v99
    %v103 = vadd.f32 %v87, %v98
    %v104 = vlaneseq
    %v105 = vshrl.u32 %v104, 7
    %v106 = vsub.s32 4, %v105
    %v107 = vrot.slane %v21, %v106
    %v108 = vmul.f32 %v48, %v107
    %v109 = vmul.f32 %v49, %v107
    %v112 = vrot.slane %v108, 1
    %v113 = vrot.slane %v109, 1
    %v114 = vsel %vm96, %v112, %v113
    %v117 = vadd.f32 %v102, %v114
    %v118 = vadd.f32 %v103, %v113
    %v119 = vlaneseq
    %v120 = vshrl.u32 %v119, 7
    %v121 = vsub.s32 5, %v120
    %v122 = vrot.slane %v21, %v121
    %v123 = vmul.f32 %v62, %v122
    %v124 = vmul.f32 %v63, %v122
    %v127 = vrot.slane %v123, 1
    %v128 = vrot.slane %v124, 1
    %v129 = vsel %vm96, %v127, %v128
    %v132 = vadd.f32 %v117, %v129
    %v133 = vadd.f32 %v118, %v128
    %v134 = vlaneseq
    %v135 = vshrl.u32 %v134, 7
    %v136 = vsub.s32 6, %v135
    %v137 = vrot.slane %v21, %v136
    %v138 = vmul.f32 %v34, %v137
    %v139 = vmul.f32 %v35, %v137
    %vm142 = vcmask 1045504
    %v143 = vrot.slane %v138, 2
    %v144 = vrot.slane %v139, 2
    %v145 = vsel %vm142, %v143, %v144
    %v148 = vadd.f32 %v132, %v145
    %v149 = vadd.f32 %v133, %v144
    %v150 = vlaneseq
    %v151 = vshrl.u32 %v150, 7
    %v152 = vsub.s32 7, %v151
    %v153 = vrot.slane %v21, %v152
    %v154 = vmul.f32 %v48, %v153
    %v155 = vmul.f32 %v49, %v153
    %v158 = vrot.slane %v154, 2
    %v159 = vrot.slane %v155, 2
    %v160 = vsel %vm142, %v158, %v159
    %v163 = vadd.f32 %v148, %v160
    %v164 = vadd.f32 %v149, %v159
    %v165 = vlaneseq
    %v166 = vshrl.u32 %v165, 7
    %v167 = vsub.s32 0, %v166
    %v168 = vrot.slane %v22, %v167
    %v169 = vmul.f32 %v62, %v168
    %v170 = vmul.f32 %v63, %v168
    %v173 = vrot.slane %v169, 2
    %v174 = vrot.slane %v170, 2
    %v175 = vsel %vm142, %v173, %v174
    %v178 = vadd.f32 %v163, %v175
    %v179 = vadd.f32 %v164, %v174
    %182 = vrot.lane.b32.xlu0 %v178, 127
    %v183 = vpop.permute.xlu0 %182
    %184 = vrot.lane.b32.xlu0 %v179, 127
    %v185 = vpop.permute.xlu0 %184
    %v188 = vmax.f32 %v178, %v183
    %v189 = vmax.f32 %v179, %v185
    %v192 = vrot.slane %v188, 1
    %v193 = vrot.slane %v189, 1
    %v194 = vsel %vm96, %v192, %v193
    %v197 = vmax.f32 %v188, %v194
    %v198 = vmax.f32 %v189, %v193
    %s199 = scalar_lea.vmem %s0, 16
    %v200 = vld [vmem:[%s199] sm:$0xff]
    %v201 = vld [vmem:[%s199 + $0x8] sm:$0xff]
    %204 = vrot.lane.b32.xlu0 %v200, 14
    %v205 = vpop.permute.xlu0 %204
    %206 = vrot.lane.b32.xlu0 %v201, 14
    %v207 = vpop.permute.xlu0 %206
    %v210 = vsel %vm33, %v200, %v205
    %v211 = vsel %vm33, %v201, %v207
    %212 = vrot.lane.b32.xlu0 %v200, 127
    %v213 = vpop.permute.xlu0 %212
    %214 = vrot.lane.b32.xlu0 %v201, 127
    %v215 = vpop.permute.xlu0 %214
    %218 = vrot.lane.b32.xlu0 %v200, 13
    %v219 = vpop.permute.xlu0 %218
    %220 = vrot.lane.b32.xlu0 %v201, 13
    %v221 = vpop.permute.xlu0 %220
    %v224 = vsel %vm33, %v213, %v219
    %v225 = vsel %vm33, %v215, %v221
    %226 = vrot.lane.b32.xlu0 %v200, 126
    %v227 = vpop.permute.xlu0 %226
    %228 = vrot.lane.b32.xlu0 %v201, 126
    %v229 = vpop.permute.xlu0 %228
    %232 = vrot.lane.b32.xlu0 %v200, 12
    %v233 = vpop.permute.xlu0 %232
    %234 = vrot.lane.b32.xlu0 %v201, 12
    %v235 = vpop.permute.xlu0 %234
    %v238 = vsel %vm33, %v227, %v233
    %v239 = vsel %vm33, %v229, %v235
    %v240 = vmul.f32 %v210, %v67
    %v241 = vmul.f32 %v211, %v67
    %v242 = vadd.f32 %v240, 0.0
    %v243 = vadd.f32 %v241, 0.0
    %v244 = vmul.f32 %v224, %v75
    %v245 = vmul.f32 %v225, %v75
    %v246 = vadd.f32 %v242, %v244
    %v247 = vadd.f32 %v243, %v245
    %v248 = vmul.f32 %v238, %v83
    %v249 = vmul.f32 %v239, %v83
    %v250 = vadd.f32 %v246, %v248
    %v251 = vadd.f32 %v247, %v249
    %v252 = vmul.f32 %v210, %v91
    %v253 = vmul.f32 %v211, %v91
    %v256 = vrot.slane %v252, 1
    %v257 = vrot.slane %v253, 1
    %v258 = vsel %vm96, %v256, %v257
    %v261 = vadd.f32 %v250, %v258
    %v262 = vadd.f32 %v251, %v257
    %v263 = vmul.f32 %v224, %v107
    %v264 = vmul.f32 %v225, %v107
    %v267 = vrot.slane %v263, 1
    %v268 = vrot.slane %v264, 1
    %v269 = vsel %vm96, %v267, %v268
    %v272 = vadd.f32 %v261, %v269
    %v273 = vadd.f32 %v262, %v268
    %v274 = vmul.f32 %v238, %v122
    %v275 = vmul.f32 %v239, %v122
    %v278 = vrot.slane %v274, 1
    %v279 = vrot.slane %v275, 1
    %v280 = vsel %vm96, %v278, %v279
    %v283 = vadd.f32 %v272, %v280
    %v284 = vadd.f32 %v273, %v279
    %v285 = vmul.f32 %v210, %v137
    %v286 = vmul.f32 %v211, %v137
    %v289 = vrot.slane %v285, 2
    %v290 = vrot.slane %v286, 2
    %v291 = vsel %vm142, %v289, %v290
    %v294 = vadd.f32 %v283, %v291
    %v295 = vadd.f32 %v284, %v290
    %v296 = vmul.f32 %v224, %v153
    %v297 = vmul.f32 %v225, %v153
    %v300 = vrot.slane %v296, 2
    %v301 = vrot.slane %v297, 2
    %v302 = vsel %vm142, %v300, %v301
    %v305 = vadd.f32 %v294, %v302
    %v306 = vadd.f32 %v295, %v301
    %v307 = vmul.f32 %v238, %v168
    %v308 = vmul.f32 %v239, %v168
    %v311 = vrot.slane %v307, 2
    %v312 = vrot.slane %v308, 2
    %v313 = vsel %vm142, %v311, %v312
    %v316 = vadd.f32 %v305, %v313
    %v317 = vadd.f32 %v306, %v312
    %320 = vrot.lane.b32.xlu0 %v316, 127
    %v321 = vpop.permute.xlu0 %320
    %322 = vrot.lane.b32.xlu0 %v317, 127
    %v323 = vpop.permute.xlu0 %322
    %v326 = vmax.f32 %v316, %v321
    %v327 = vmax.f32 %v317, %v323
    %v330 = vrot.slane %v326, 1
    %v331 = vrot.slane %v327, 1
    %v332 = vsel %vm96, %v330, %v331
    %v335 = vmax.f32 %v326, %v332
    %v336 = vmax.f32 %v327, %v331
    %339 = vrot.lane.b32.xlu0 %v335, 27
    %v340 = vpop.permute.xlu0 %339
    %341 = vrot.lane.b32.xlu0 %v336, 27
    %v342 = vpop.permute.xlu0 %341
    %vm345 = vcmask 220160
    %v346 = vsel %vm345, %v197, %v340
    %v347 = vsel %vm345, %v198, %v342
    %v348 = vld [vmem:[%s3] sm:$0x7f]
    %vm349 = vcmask 105472
    %v351 = vsel %vm349, %v348, 0
    %vm353 = vcmask 1044480
    %v355 = vsel %vm353, %v347, 0
    %357 = vmatprep.subr.mxu0 0.0
    %358 = vmatpush1.msra.mxu0 %v346
    %359 = vmatprep.subr.mxu0 0.0
    %360 = vmatpush1.msra.mxu0 %v355
    %361 = vmatprep.subr.mxu0 0.0
    %362 = vmatpush1.msra.mxu0 0.0
    %363 = vmatprep.subr.mxu0 0.0
    %364 = vmatpush1.msra.mxu0 0.0
    %365 = vmatprep.subr.mxu0 0.0
    %366 = vmatpush1.msra.mxu0 0.0
    %367 = vmatprep.subr.mxu0 0.0
    %368 = vmatpush1.msra.mxu0 0.0
    %369 = vmatprep.subr.mxu0 0.0
    %370 = vmatpush1.msra.mxu0 0.0
    %371 = vmatprep.subr.mxu0 0.0
    %372 = vmatpush1.msra.mxu0 0.0
    %373 = vmatprep.subr.mxu0 0.0
    %374 = vmatpush1.msra.mxu0 0.0
    %375 = vmatprep.subr.mxu0 0.0
    %376 = vmatpush1.msra.mxu0 0.0
    %377 = vmatprep.subr.mxu0 0.0
    %378 = vmatpush1.msra.mxu0 0.0
    %379 = vmatprep.subr.mxu0 0.0
    %380 = vmatpush1.msra.mxu0 0.0
    %381 = vmatprep.subr.mxu0 0.0
    %382 = vmatpush1.msra.mxu0 0.0
    %383 = vmatprep.subr.mxu0 0.0
    %384 = vmatpush1.msra.mxu0 0.0
    %385 = vmatprep.subr.mxu0 0.0
    %386 = vmatpush1.msra.mxu0 0.0
    %387 = vmatprep.subr.mxu0 0.0
    %388 = vmatpush1.msra.mxu0 0.0
    %389 = vmatprep.subr.mxu0 0.0
    %390 = vmatpush1.msra.mxu0 0.0
    %391 = vmatprep.subr.mxu0 0.0
    %392 = vmatpush1.msra.mxu0 0.0
    %393 = vmatprep.subr.mxu0 0.0
    %394 = vmatpush1.msra.mxu0 0.0
    %395 = vmatprep.subr.mxu0 0.0
    %396 = vmatpush1.msra.mxu0 0.0
    %397 = vmatprep.subr.mxu0 0.0
    %398 = vmatpush1.msra.mxu0 0.0
    %399 = vmatprep.subr.mxu0 0.0
    %400 = vmatpush1.msra.mxu0 0.0
    %401 = vmatprep.subr.mxu0 0.0
    %402 = vmatpush1.msra.mxu0 0.0
    %403 = vmatprep.subr.mxu0 0.0
    %404 = vmatpush1.msra.mxu0 0.0
    %405 = vmatprep.subr.mxu0 0.0
    %406 = vmatpush1.msra.mxu0 0.0
    %407 = vmatprep.subr.mxu0 0.0
    %408 = vmatpush1.msra.mxu0 0.0
    %409 = vmatprep.subr.mxu0 0.0
    %410 = vmatpush1.msra.mxu0 0.0
    %411 = vmatprep.subr.mxu0 0.0
    %412 = vmatpush1.msra.mxu0 0.0
    %413 = vmatprep.subr.mxu0 0.0
    %414 = vmatpush1.msra.mxu0 0.0
    %415 = vmatprep.subr.mxu0 0.0
    %416 = vmatpush1.msra.mxu0 0.0
    %417 = vmatprep.subr.mxu0 0.0
    %418 = vmatpush1.msra.mxu0 0.0
    %419 = vmatprep.subr.mxu0 0.0
    %420 = vmatpush1.msra.mxu0 0.0
    %421 = vmatprep.mubr.f32.mxu0 0.0
    %422 = vmatmul.mubr.f32.gmra.mrb[0].mxu0 %v351
    %v423 = vpop.f32.mrb[0].mxu0
    %v424 = vadd.f32 0.0, %v423
    %v425 = vpop.f32.mrb[0].mxu0
    %426 = vdwg.mxu0
    %v427 = vld [vmem:[%s4] sm:$0xff]
    %v428 = vld [vmem:[%s4 + $0x8] sm:$0xff]
    %v429 = vld [vmem:[%s4 + $0x10] sm:$0xff]
    %v430 = vld [vmem:[%s4 + $0x18] sm:$0xff]
    %v431 = vld [vmem:[%s4 + $0x20] sm:$0xff]
    %v432 = vld [vmem:[%s4 + $0x28] sm:$0xff]
    %v433 = vld [vmem:[%s4 + $0x30] sm:$0x3f]
    %v434 = vld [vmem:[%s2] sm:$0x1]
    %v436 = vlaneseq
    %v437 = vshrl.u32 %v436, 7
    %v438 = vsub.s32 0, %v437
    %v439 = vrot.slane %v434, %v438
    %vm441 = vcmask 441344
    %v443 = vsel %vm441, %v424, 0
    %v446 = vsel %vm142, %v433, 0
    %448 = vmatprep.subr.mxu0 0.0
    %449 = vmatpush1.msra.mxu0 %v427
    %450 = vmatprep.subr.mxu0 0.0
    %451 = vmatpush1.msra.mxu0 %v428
    %452 = vmatprep.subr.mxu0 0.0
    %453 = vmatpush1.msra.mxu0 %v429
    %454 = vmatprep.subr.mxu0 0.0
    %455 = vmatpush1.msra.mxu0 %v430
    %456 = vmatprep.subr.mxu0 0.0
    %457 = vmatpush1.msra.mxu0 %v431
    %458 = vmatprep.subr.mxu0 0.0
    %459 = vmatpush1.msra.mxu0 %v432
    %460 = vmatprep.subr.mxu0 0.0
    %461 = vmatpush1.msra.mxu0 %v446
    %462 = vmatprep.subr.mxu0 0.0
    %463 = vmatpush1.msra.mxu0 0.0
    %464 = vmatprep.subr.mxu0 0.0
    %465 = vmatpush1.msra.mxu0 0.0
    %466 = vmatprep.subr.mxu0 0.0
    %467 = vmatpush1.msra.mxu0 0.0
    %468 = vmatprep.subr.mxu0 0.0
    %469 = vmatpush1.msra.mxu0 0.0
    %470 = vmatprep.subr.mxu0 0.0
    %471 = vmatpush1.msra.mxu0 0.0
    %472 = vmatprep.subr.mxu0 0.0
    %473 = vmatpush1.msra.mxu0 0.0
    %474 = vmatprep.subr.mxu0 0.0
    %475 = vmatpush1.msra.mxu0 0.0
    %476 = vmatprep.subr.mxu0 0.0
    %477 = vmatpush1.msra.mxu0 0.0
    %478 = vmatprep.subr.mxu0 0.0
    %479 = vmatpush1.msra.mxu0 0.0
    %480 = vmatprep.subr.mxu0 0.0
    %481 = vmatpush1.msra.mxu0 0.0
    %482 = vmatprep.subr.mxu0 0.0
    %483 = vmatpush1.msra.mxu0 0.0
    %484 = vmatprep.subr.mxu0 0.0
    %485 = vmatpush1.msra.mxu0 0.0
    %486 = vmatprep.subr.mxu0 0.0
    %487 = vmatpush1.msra.mxu0 0.0
    %488 = vmatprep.subr.mxu0 0.0
    %489 = vmatpush1.msra.mxu0 0.0
    %490 = vmatprep.subr.mxu0 0.0
    %491 = vmatpush1.msra.mxu0 0.0
    %492 = vmatprep.subr.mxu0 0.0
    %493 = vmatpush1.msra.mxu0 0.0
    %494 = vmatprep.subr.mxu0 0.0
    %495 = vmatpush1.msra.mxu0 0.0
    %496 = vmatprep.subr.mxu0 0.0
    %497 = vmatpush1.msra.mxu0 0.0
    %498 = vmatprep.subr.mxu0 0.0
    %499 = vmatpush1.msra.mxu0 0.0
    %500 = vmatprep.subr.mxu0 0.0
    %501 = vmatpush1.msra.mxu0 0.0
    %502 = vmatprep.subr.mxu0 0.0
    %503 = vmatpush1.msra.mxu0 0.0
    %504 = vmatprep.subr.mxu0 0.0
    %505 = vmatpush1.msra.mxu0 0.0
    %506 = vmatprep.subr.mxu0 0.0
    %507 = vmatpush1.msra.mxu0 0.0
    %508 = vmatprep.subr.mxu0 0.0
    %509 = vmatpush1.msra.mxu0 0.0
    %510 = vmatprep.subr.mxu0 0.0
    %511 = vmatpush1.msra.mxu0 0.0
    %512 = vmatprep.mubr.f32.mxu0 0.0
    %513 = vmatmul.mubr.f32.gmra.mrb[0].mxu0 %v443
    %v514 = vpop.f32.mrb[0].mxu0
    %v515 = vadd.f32 %v439, %v514
    %v516 = vpop.f32.mrb[0].mxu0
    %517 = vdwg.mxu0
    %vm518 = vcmask 227328
    %519 = vst.msk [vmem:[#allocation2] sm:$0x7f] %vm518, %v515
    // Predicated region
    $region22: #{tpu_custom_call.1} parent=1 // pred_check
      _
    $region23: #{tpu_custom_call.1} parent=1 // pred_check_branch
      %521 = sbr.rel (0) target = $region25
    $region24: #{tpu_custom_call.1} parent=1 // pred_region
      %s523 = ssub.s32 128, 128
      %524 = vsyncadd [#allocation3], %s523
      %s526 = sshll.u32 [#allocation2], 4
      %s527 = int_to_ptr.vmem [resolvable:$true] %s526
      %529 = dma.vmem_to_hbm [thread:$0]  %s527, 128, %s5, [#allocation3]
    $region25: #{tpu_custom_call.1} parent=1 // pred_fallthru
      _
    // Predicated region
    $region26: #{tpu_custom_call.1} parent=1 // pred_check
      _
    $region27: #{tpu_custom_call.1} parent=1 // pred_check_branch
      %531 = sbr.rel (0) target = $region29
    $region28: #{tpu_custom_call.1} parent=1 // pred_region
      %532 = dma.done [#allocation3], 128
    $region29: #{tpu_custom_call.1} parent=1 // pred_fallthru
      _
    %533 = vsyncpa [#allocation3], 1

</llo_original>
